<compile_context>
chip_gen: v6e
topology: v6e:2x2x1
jax: 0.10.0
libtpu: 0.0.40
codegen_flags: <defaults>
</compile_context>

<pallas_src>
import functools

import jax
import jax.numpy as jnp
from jax.experimental import pallas as pl
from jax.experimental.pallas import tpu as pltpu


def _round_up(x, m):
    return ((x + m - 1) // m) * m


def _pad_cast(arr, shape, dtype, fill=0.0):
    """Cast and (only if needed) fill-pad `arr` up to `shape`."""
    arr = arr.astype(dtype)
    if tuple(arr.shape) == tuple(shape):
        return arr
    buf = jnp.full(shape, fill, dtype=dtype)
    return buf.at[tuple(slice(0, s) for s in arr.shape)].set(arr)


def _vmem_limit_bytes():
    """Per-chip scoped-VMEM budget: ~75% of physical (96 MiB v5e/v6e, 48 MiB v7x)."""
    cap = 64 * 1024 * 1024  # conservative default (v7x-sized VMEM)
    try:
        info_cap = int(pltpu.get_tpu_info().vmem_capacity_bytes)
        if info_cap > 0:
            cap = info_cap
    except Exception:
        pass
    return max(32 * 1024 * 1024, min(cap * 3 // 4, 100 * 1024 * 1024))


def _phase2_vmem_bytes(tn, tk, NP, HP, CP, resident):
    """Rough phase-2 VMEM estimate (double-buffered BlockSpec inputs/outputs)."""
    bf16_b, f32_b = 2, 4
    a_blk = 2 * tn * tk * bf16_b
    xw = (2 * NP * HP * bf16_b) if resident else (2 * tk * HP * bf16_b)
    out_blk = 2 * tn * CP * f32_b
    acc = tn * HP * f32_b
    wl = 2 * HP * CP * bf16_b
    small = 2 * (2 * HP * f32_b + CP * f32_b)
    return a_blk + xw + out_blk + acc + wl + small


# --------------------------------------------------------------------------
# Phase 1: XW = X @ W_gcn   (computed once, not per A_hat row tile)
# --------------------------------------------------------------------------
def xw_kernel(x_ref, wg_ref, xw_ref):
    xw_ref[...] = jnp.dot(
        x_ref[...], wg_ref[...], preferred_element_type=jnp.float32
    ).astype(xw_ref.dtype)


# --------------------------------------------------------------------------
# Phase 2: row-tiled A_hat aggregation + bias + PReLU + Linear + log_softmax
# --------------------------------------------------------------------------
def classifier_kernel(a_ref, xw_ref, bg_ref, alpha_ref, wl_ref, bl_ref,
                      out_ref, acc_ref, *, tk, resident):
    k = pl.program_id(1)

    @pl.when(k == 0)
    def _init():
        acc_ref[...] = jnp.zeros_like(acc_ref)

    if resident:
        # Full XW lives in VMEM (fetched once for the whole grid);
        # slice out the current K slab.
        xw_blk = xw_ref[pl.ds(pl.multiple_of(k * tk, tk), tk), :]
    else:
        xw_blk = xw_ref[...]

    # Accumulate A_hat[i, k] @ XW[k]  (bf16 operands, f32 accumulation on MXU).
    acc_ref[...] += jnp.dot(a_ref[...], xw_blk,
                            preferred_element_type=jnp.float32)

    @pl.when(k == pl.num_programs(1) - 1)
    def _finalize():
        h = acc_ref[...] + bg_ref[...]                 # GCNConv bias
        h = jnp.where(h >= 0, h, alpha_ref[...] * h)   # PReLU (per-channel alpha)
        # (x.detach() is a no-op in the forward pass.)
        logits = jnp.dot(
            h.astype(wl_ref.dtype), wl_ref[...],
            preferred_element_type=jnp.float32,
        ) + bl_ref[...]
        # Padded class lanes carry bias -1e30 (set in the wrapper), so they
        # vanish from max / logsumexp without any in-kernel mask.
        m = jnp.max(logits, axis=-1, keepdims=True)
        shifted = logits - m
        lse = jnp.log(jnp.sum(jnp.exp(shifted), axis=-1, keepdims=True))
        out_ref[...] = (shifted - lse).astype(out_ref.dtype)


# --------------------------------------------------------------------------
# Wrapper
# --------------------------------------------------------------------------
def classifier_forward(a_hat, x, w_gcn, b_gcn, alpha, w_lin, b_lin,
                       *, tn=512, tk=256):
    N, F = x.shape
    H = w_gcn.shape[1]
    C = w_lin.shape[1]

    f32, bf16 = jnp.float32, jnp.bfloat16

    # ---- Tile-size selection (multiples of 128; tk divides tn) ------------
    assert tn % 128 == 0 and tk % 128 == 0
    NP0 = _round_up(N, 128)
    tn = min(tn, NP0)
    tk = min(tk, NP0)
    # v7x megacore balance: keep >= 2 row tiles when there is room to split.
    if NP0 // tn < 2 and NP0 >= 256:
        tn = _round_up(NP0 // 2, 128)
    while tn % tk != 0:          # keep tk a divisor of tn (NP multiple of both)
        tk -= 128

    NP = _round_up(N, tn)
    FP = _round_up(F, 128)
    HP = _round_up(H, 128)
    CP = _round_up(C, 128)
    n_row, n_k = NP // tn, NP // tk

    # ---- VMEM budget & resident-XW decision --------------------------------
    vmem_limit = _vmem_limit_bytes()
    resident = (_phase2_vmem_bytes(tn, tk, NP, HP, CP, True)
                <= int(0.85 * vmem_limit))
    cparams = dict(vmem_limit_bytes=vmem_limit)

    # ---- Pad / cast inputs (copies skipped when already aligned) -----------
    a_p = _pad_cast(a_hat, (NP, NP), bf16)
    x_p = _pad_cast(x, (NP, FP), bf16)
    wg_p = _pad_cast(w_gcn, (FP, HP), bf16)
    bg_p = _pad_cast(jnp.reshape(b_gcn, (1, -1)), (1, HP), f32)
    al_p = _pad_cast(jnp.reshape(alpha, (1, -1)), (1, HP), f32)
    wl_p = _pad_cast(w_lin, (HP, CP), bf16)
    # Padded class lanes get bias -1e30 -> padded logits are exactly -1e30.
    bl_p = _pad_cast(jnp.reshape(b_lin, (1, -1)), (1, CP), f32, fill=-1e30)

    # ---------------- Phase 1: XW = X @ W_gcn (once) ------------------------
    xw = pl.pallas_call(
        xw_kernel,
        out_shape=jax.ShapeDtypeStruct((NP, HP), bf16),
        grid_spec=pltpu.PrefetchScalarGridSpec(
            num_scalar_prefetch=0,
            grid=(n_row,),
            in_specs=[
                pl.BlockSpec((tn, FP), lambda i: (i, 0)),
                pl.BlockSpec((FP, HP), lambda i: (0, 0)),
            ],
            out_specs=pl.BlockSpec((tn, HP), lambda i: (i, 0)),
        ),
        compiler_params=pltpu.CompilerParams(
            dimension_semantics=("parallel",), **cparams),
    )(x_p, wg_p)

    # ---------------- Phase 2: aggregation + head ---------------------------
    if resident:
        # Whole XW as a single block: constant index map -> DMA'd only once.
        xw_spec = pl.BlockSpec((NP, HP), lambda i, k: (0, 0))
    else:
        # Streamed K slab (fallback for very large N / small-VMEM parts).
        xw_spec = pl.BlockSpec((tk, HP), lambda i, k: (k, 0))

    kern = functools.partial(classifier_kernel, tk=tk, resident=resident)
    out_p = pl.pallas_call(
        kern,
        out_shape=jax.ShapeDtypeStruct((NP, CP), f32),
        grid_spec=pltpu.PrefetchScalarGridSpec(
            num_scalar_prefetch=0,
            grid=(n_row, n_k),
            in_specs=[
                pl.BlockSpec((tn, tk), lambda i, k: (i, k)),   # A_hat row slab
                xw_spec,                                       # XW
                pl.BlockSpec((1, HP), lambda i, k: (0, 0)),    # b_gcn
                pl.BlockSpec((1, HP), lambda i, k: (0, 0)),    # alpha
                pl.BlockSpec((HP, CP), lambda i, k: (0, 0)),   # W_lin
                pl.BlockSpec((1, CP), lambda i, k: (0, 0)),    # b_lin (pad=-1e30)
            ],
            out_specs=pl.BlockSpec((tn, CP), lambda i, k: (i, 0)),
            scratch_shapes=[pltpu.VMEM((tn, HP), jnp.float32)],
        ),
        compiler_params=pltpu.CompilerParams(
            dimension_semantics=("parallel", "arbitrary"), **cparams),
    )(a_p, xw, bg_p, al_p, wl_p, bl_p)

    return out_p[:N, :C]


def build_normalized_adjacency(edge_index, num_nodes):
    """Dense A_hat = D^{-1/2} (A + I) D^{-1/2} (GCNConv normalization).

    Self-loops are set (not added), matching add_remaining_self_loops.
    """
    src, dst = edge_index
    adj = jnp.zeros((num_nodes, num_nodes), dtype=jnp.float32)
    adj = adj.at[dst, src].set(1.0)                       # message src -> dst
    diag = jnp.arange(num_nodes)
    adj = adj.at[diag, diag].set(1.0)                     # remaining self-loops
    deg = jnp.sum(adj, axis=1)
    d_inv_sqrt = jnp.where(deg > 0, 1.0 / jnp.sqrt(deg), 0.0)
    return adj * d_inv_sqrt[:, None] * d_inv_sqrt[None, :]


def _reference_forward(a_hat, x, w_gcn, b_gcn, alpha, w_lin, b_lin):
    h = a_hat @ (x @ w_gcn) + b_gcn
    h = jnp.where(h >= 0, h, alpha * h)
    logits = h @ w_lin + b_lin
    return jax.nn.log_softmax(logits, axis=-1)


if __name__ == "__main__":
    # Small shapes consistent with the module (nodes, features, hidden, classes).
    N = 256    # num_nodes
    F = 64     # data.num_features
    H = 128    # hidden_dim (512 in the original script; kept small here)
    C = 7      # data.num_classes

    key = jax.random.PRNGKey(0)
    k_x, k_wg, k_wl, k_bl = jax.random.split(key, 4)

    # Node features.
    x = jax.random.normal(k_x, (N, F), dtype=jnp.float32)

    # Deterministic ring graph (undirected: both directions).
    idx = jnp.arange(N)
    src = jnp.concatenate([idx, (idx + 1) % N])
    dst = jnp.concatenate([(idx + 1) % N, idx])
    edge_index = jnp.stack([src, dst])
    a_hat = build_normalized_adjacency(edge_index, N)

    # GCNConv parameters (glorot-ish weight, zero bias).
    w_gcn = jax.random.normal(k_wg, (F, H), dtype=jnp.float32) * (1.0 / jnp.sqrt(F))
    b_gcn = jnp.zeros((1, H), dtype=jnp.float32)

    # PReLU per-channel alpha (nn.PReLU(hidden_dim), default init 0.25).
    alpha = jnp.full((1, H), 0.25, dtype=jnp.float32)

    # Linear(hidden_dim, num_classes) stored as (H, C) = weight.T
    w_lin = jax.random.normal(k_wl, (H, C), dtype=jnp.float32) * (1.0 / jnp.sqrt(H))
    b_lin = (jax.random.uniform(k_bl, (1, C), dtype=jnp.float32) - 0.5) * (2.0 / jnp.sqrt(H))

    out = classifier_forward(a_hat, x, w_gcn, b_gcn, alpha, w_lin, b_lin)
    out = jax.block_until_ready(out)

    # Sanity 1: log_softmax rows exponentiate-sum to 1.
    row_sums = jnp.sum(jnp.exp(out), axis=-1)
    assert out.shape == (N, C)
    assert bool(jnp.all(jnp.abs(row_sums - 1.0) < 1e-3))

    # Sanity 2: matches a pure-JAX f32 reference (bf16 matmuls -> loose tol).
    ref = _reference_forward(a_hat, x, w_gcn, b_gcn, alpha, w_lin, b_lin)
    max_err = float(jnp.max(jnp.abs(out - ref)))
    assert max_err < 1e-1, f"max abs error vs reference: {max_err}"

    print("KERNEL_OK")
</pallas_src>

<mosaic_0001>
module attributes {stable_mosaic.version = 11 : i64} {
  func.func @xw_kernel(%arg0: i32, %arg1: memref<128x128xbf16, #tpu.memory_space<vmem>>, %arg2: memref<128x128xbf16, #tpu.memory_space<vmem>>, %arg3: memref<128x128xbf16, #tpu.memory_space<vmem>>) attributes {dimension_semantics = [#tpu.dimension_semantics<parallel>], iteration_bounds = array<i64: 2>, scalar_prefetch = 0 : i64, scratch_operands = 0 : i64, tpu.core_type = #tpu.core_type<tc>, window_params = [{transform_indices = @transform_0, window_bounds = array<i64: 128, 128>}, {pipeline_mode = #tpu.pipeline_mode<synchronous>, transform_indices = @transform_1, window_bounds = array<i64: 128, 128>}, {transform_indices = @transform_2, window_bounds = array<i64: 128, 128>}]} {
    %c0 = arith.constant 0 : index
    %c0_0 = arith.constant 0 : index
    %0 = vector.load %arg1[%c0, %c0_0] : memref<128x128xbf16, #tpu.memory_space<vmem>>, vector<128x128xbf16>
    %c0_1 = arith.constant 0 : index
    %c0_2 = arith.constant 0 : index
    %1 = vector.load %arg2[%c0_1, %c0_2] : memref<128x128xbf16, #tpu.memory_space<vmem>>, vector<128x128xbf16>
    %cst = arith.constant dense<0.000000e+00> : vector<128x128xf32>
    %2 = tpu.matmul %0, %1, %cst {dimension_numbers = #tpu.dot_dimension_numbers<[1], [0], [0], [1], [0, 0, 1, 1], [], []>} : vector<128x128xbf16>, vector<128x128xbf16>, vector<128x128xf32> -> vector<128x128xf32>
    %3 = arith.truncf %2 : vector<128x128xf32> to vector<128x128xbf16>
    %c0_3 = arith.constant 0 : index
    %c0_4 = arith.constant 0 : index
    %4 = vector.load %arg3[%c0_3, %c0_4] : memref<128x128xbf16, #tpu.memory_space<vmem>>, vector<128x128xbf16>
    tpu.vector_store %arg3[%c0_3, %c0_4], %3 {strides = array<i32>} : memref<128x128xbf16, #tpu.memory_space<vmem>>, vector<128x128xbf16>,
    return
  }
  func.func @transform_0(%arg0: i32) -> (i32, i32) {
    %c0_i32 = arith.constant 0 : i32
    %c0_i32_0 = arith.constant 0 : i32
    return %arg0, %c0_i32 : i32, i32
  }
  func.func @transform_1(%arg0: i32) -> (i32, i32) {
    %c0_i32 = arith.constant 0 : i32
    %c0_i32_0 = arith.constant 0 : i32
    %c0_i32_1 = arith.constant 0 : i32
    return %c0_i32, %c0_i32_0 : i32, i32
  }
  func.func @transform_2(%arg0: i32) -> (i32, i32) {
    %c0_i32 = arith.constant 0 : i32
    %c0_i32_0 = arith.constant 0 : i32
    return %arg0, %c0_i32 : i32, i32
  }
}

</mosaic_0001>

<llo_original>
// kernel: tpu_custom_call.1
$region0: #{tpu_custom_call.1}
  #allocation0 [shape = 'u32[]', space=smem, size = 0x4, offset = 0x4, fixed_abs, tag = 'smem constant byte address 0x4 - core index']
  #allocation1 [shape = 'u32[144,128]{1,0:T(1,128)}', space=vmem, size = 0x12000, scoped, tag = 'internal scratch']
  %s0 = inlined_call_operand.hbm [shape: bf16[256,128], index: 0, kind: input, shape index: {}]
  %s1 = inlined_call_operand.hbm [shape: bf16[128,128], index: 1, kind: input, shape index: {}]
  %s2 = inlined_call_operand.hbm [shape: bf16[256,128], index: 2, kind: output, shape index: {}]
  %s3 = sld [smem:[#allocation0]]
  $region49: #{tpu_custom_call.1} parent=0
    _
  %s5 = ssub.s32 1, %s3
  %s6 = scalar_select 0, %s5, %s3
  $region1: #{tpu_custom_call.1} parent=0
    #allocation2 [shape = 'u8[65536]{0}', space=vmem, size = 0x10000, scoped, tag = 'input window, operand 0']
    #allocation3 [shape = 's32[2]{0}', space=sflag, size = 0x8, scoped, tag = 'scoped memory for tpu_custom_call.1']
    #allocation4 [shape = 's32[2]{0}', space=sflag, size = 0x8, scoped, tag = 'scoped memory for tpu_custom_call.1']
    #allocation5 [shape = 'u8[32768]{0}', space=vmem, size = 0x8000, scoped, tag = 'input window, operand 1, single buffered']
    #allocation6 [shape = 's32[1]{0}', space=sflag, size = 0x4, scoped, tag = 'scoped memory for tpu_custom_call.1']
    #allocation7 [shape = 'u8[65536]{0}', space=vmem, size = 0x10000, scoped, tag = 'output window, operand 0']
    %7 = vsyncpa [#allocation3], 0
    %s8 = scalar_lea.sflag [#allocation3], 1
    %9 = vsyncpa %s8, 0
    %10 = vsyncpa [#allocation6], 0
    %11 = vsyncpa [#allocation4], 0
    %s12 = scalar_lea.sflag [#allocation4], 1
    %13 = vsyncpa %s12, 0
    loop: start=0, step=1, limit=4
    $region2: #{tpu_custom_call.1} parent=1 // loop_pre_header
      _
    $region3: #{tpu_custom_call.1} parent=1 // loop_header
      %s15 = sphi 0, %s19
      %p16 = scmp.ge.s32.totalorder %s15, 4
      %s25 = sphi 0, %s27
      %s28 = sphi 0, %s25
      %s29 = sphi 0, %s28
      %s45 = sphi 0, %s29
      %s49 = sphi 0, %s49
      %s51 = sphi 0, %s49
      %s52 = sphi 0, %s51
      %s66 = sphi 0, %s52
      %s72 = sphi 0, %s74
      %s75 = sphi 0, %s72
      %s76 = sphi 0, %s75
      %s92 = sphi 0, %s76
    $region4: #{tpu_custom_call.1} parent=1 // loop_header_branch
      %18 = sbr.rel (%p16) target = $region8
    $region5: #{tpu_custom_call.1} parent=1 // loop_body
      %s20 = ssub.s32 %s15, 1
      %s21 = ssub.s32 %s15, 2
      %s22 = sadd.s32 %s15, 1
      %s23 = ssub.s32 %s15, %s22
      %p24 = scmp.eq.s32.totalorder %s23, 0
      %s26 = sadd.s32 %s25, 1
      %s27 = scalar_select %p24, %s25, %s26
      %p30 = pneg %p24
      %p31 = scmp.eq.s32.totalorder %s15, 1
      %p32 = por %p30, %p31
      %p33 = scmp.ne.s32.totalorder %s25, %s28
      %p34 = scmp.eq.s32.totalorder %s15, 0
      %p35 = por %p33, %p34
      %p36 = scmp.ne.s32.totalorder %s25, %s28
      %p37 = scmp.eq.s32.totalorder %s20, 1
      %p38 = por %p36, %p37
      %p39 = scmp.ne.s32.totalorder %s28, %s29
      %p40 = scmp.eq.s32.totalorder %s20, 0
      %p41 = por %p39, %p40
      %p42 = scmp.ne.s32.totalorder %s28, %s29
      %p43 = scmp.eq.s32.totalorder %s21, 1
      %p44 = por %p42, %p43
      %p46 = scmp.ne.s32.totalorder %s29, %s45
      %p47 = scmp.eq.s32.totalorder %s21, 0
      %p48 = por %p46, %p47
      %s50 = sadd.s32 %s49, 1
      %p53 = scmp.eq.s32.totalorder %s15, 1
      %p54 = scmp.ne.s32.totalorder %s49, %s51
      %p55 = scmp.eq.s32.totalorder %s15, 0
      %p56 = por %p54, %p55
      %p57 = scmp.ne.s32.totalorder %s49, %s51
      %p58 = scmp.eq.s32.totalorder %s20, 1
      %p59 = por %p57, %p58
      %p60 = scmp.ne.s32.totalorder %s51, %s52
      %p61 = scmp.eq.s32.totalorder %s20, 0
      %p62 = por %p60, %p61
      %p63 = scmp.ne.s32.totalorder %s51, %s52
      %p64 = scmp.eq.s32.totalorder %s21, 1
      %p65 = por %p63, %p64
      %p67 = scmp.ne.s32.totalorder %s52, %s66
      %p68 = scmp.eq.s32.totalorder %s21, 0
      %p69 = por %p67, %p68
      %s70 = ssub.s32 %s15, %s22
      %p71 = scmp.eq.s32.totalorder %s70, 0
      %s73 = sadd.s32 %s72, 1
      %s74 = scalar_select %p71, %s72, %s73
      %p77 = pneg %p71
      %p78 = scmp.eq.s32.totalorder %s15, 1
      %p79 = por %p77, %p78
      %p80 = scmp.ne.s32.totalorder %s72, %s75
      %p81 = scmp.eq.s32.totalorder %s15, 0
      %p82 = por %p80, %p81
      %p83 = scmp.ne.s32.totalorder %s72, %s75
      %p84 = scmp.eq.s32.totalorder %s20, 1
      %p85 = por %p83, %p84
      %p86 = scmp.ne.s32.totalorder %s75, %s76
      %p87 = scmp.eq.s32.totalorder %s20, 0
      %p88 = por %p86, %p87
      %p89 = scmp.ne.s32.totalorder %s75, %s76
      %p90 = scmp.eq.s32.totalorder %s21, 1
      %p91 = por %p89, %p90
      %p93 = scmp.ne.s32.totalorder %s76, %s92
      %p94 = scmp.eq.s32.totalorder %s21, 0
      %p95 = por %p93, %p94
      %p96 = scmp.le.s32.totalorder 1, %s15
      %p97 = scmp.lt.s32.totalorder %s15, 3
      %p98 = pnand %p96, %p97
      %p99 = pneg %p98
      // Predicated region
      $region9: #{tpu_custom_call.1} parent=5 // pred_check
        _
      $region10: #{tpu_custom_call.1} parent=5 // pred_check_branch
        %101 = sbr.rel (%p98) target = $region12
      $region11: #{tpu_custom_call.1} parent=5 // pred_region
        %s102 = ssub.s32 %s15, 1
        // Predicated region
        $region13: #{tpu_custom_call.1} parent=11 // pred_check
          %p103 = pneg %p62
        $region14: #{tpu_custom_call.1} parent=11 // pred_check_branch
          %105 = sbr.rel (%p103) target = $region16
        $region15: #{tpu_custom_call.1} parent=11 // pred_region
          %s107 = ssub.s32 1024, 1024
          %108 = vsyncadd [#allocation6], %s107
          %s109 = sshll.u32 [#allocation5], 4
          %s110 = int_to_ptr.vmem [resolvable:$true] %s109
          %115 = dma.hbm_to_vmem [thread:$0]  %s1, 1024, %s110, [#allocation6], 64, 64, 4
        $region16: #{tpu_custom_call.1} parent=11 // pred_fallthru
          _
      $region12: #{tpu_custom_call.1} parent=5 // pred_fallthru
        _
      %p116 = scmp.lt.s32.totalorder %s15, 2
      // Predicated region
      $region17: #{tpu_custom_call.1} parent=5 // pred_check
        %p117 = pneg %p116
      $region18: #{tpu_custom_call.1} parent=5 // pred_check_branch
        %119 = sbr.rel (%p117) target = $region20
      $region19: #{tpu_custom_call.1} parent=5 // pred_region
        // Predicated region
        $region21: #{tpu_custom_call.1} parent=19 // pred_check
          %p120 = pneg %p35
        $region22: #{tpu_custom_call.1} parent=19 // pred_check_branch
          %122 = sbr.rel (%p120) target = $region24
        $region23: #{tpu_custom_call.1} parent=19 // pred_region
          %s123 = sand.u32 %s25, 1
          %s124 = scalar_lea.sflag [#allocation3], %s123
          %s125 = sand.u32 %s25, 1
          %s126 = smul.addr %s125, 64
          %s127 = scalar_lea.vmem [#allocation2], %s126
          %s128 = smul.u32 16, %s15
          %s130 = ssub.s32 1024, 1024
          %131 = vsyncadd %s124, %s130
          %s132 = smul.addr %s128, 64
          %s133 = scalar_lea.hbm %s0, %s132
          %s134 = sshll.u32 %s127, 4
          %s135 = int_to_ptr.vmem [resolvable:$true] %s134
          %140 = dma.hbm_to_vmem [thread:$0]  %s133, 1024, %s135, %s124, 64, 64, 4
        $region24: #{tpu_custom_call.1} parent=19 // pred_fallthru
          _
      $region20: #{tpu_custom_call.1} parent=5 // pred_fallthru
        _
      %p141 = scmp.le.s32.totalorder 1, %s15
      %p142 = scmp.lt.s32.totalorder %s15, 3
      %p143 = pnand %p141, %p142
      %p144 = pneg %p143
      // Predicated region
      $region25: #{tpu_custom_call.1} parent=5 // pred_check
        _
      $region26: #{tpu_custom_call.1} parent=5 // pred_check_branch
        %146 = sbr.rel (%p143) target = $region28
      $region27: #{tpu_custom_call.1} parent=5 // pred_region
        %s147 = ssub.s32 %s15, 1
        %s148 = sand.u32 %s28, 1
        %s149 = scalar_lea.sflag [#allocation3], %s148
        %s150 = sand.u32 %s28, 1
        %s151 = smul.addr %s150, 64
        %s152 = scalar_lea.vmem [#allocation2], %s151
        // Predicated region
        $region29: #{tpu_custom_call.1} parent=27 // pred_check
          %p153 = pneg %p41
        $region30: #{tpu_custom_call.1} parent=27 // pred_check_branch
          %155 = sbr.rel (%p153) target = $region32
        $region31: #{tpu_custom_call.1} parent=27 // pred_region
          %156 = dma.done %s149, 1024
        $region32: #{tpu_custom_call.1} parent=27 // pred_fallthru
          _
        // Predicated region
        $region33: #{tpu_custom_call.1} parent=27 // pred_check
          %p157 = pneg %p62
        $region34: #{tpu_custom_call.1} parent=27 // pred_check_branch
          %159 = sbr.rel (%p157) target = $region36
        $region35: #{tpu_custom_call.1} parent=27 // pred_region
          %160 = dma.done [#allocation6], 1024
        $region36: #{tpu_custom_call.1} parent=27 // pred_fallthru
          _
        %s161 = sand.u32 %s28, 1
        %s162 = scalar_lea.sflag [#allocation3], %s161
        %s163 = sand.u32 %s28, 1
        %s164 = smul.addr %s163, 64
        %s165 = scalar_lea.vmem [#allocation2], %s164
        %p166 = pneg %p41
        %p167 = pneg %p38
        %p168 = pneg %p62
        %p169 = pneg %p59
        %p170 = pneg %p88
        %p171 = pneg %p85
        %s172 = sand.u32 %s75, 1
        %s173 = scalar_lea.sflag [#allocation4], %s172
        %s174 = sand.u32 %s75, 1
        %s175 = smul.addr %s174, 64
        %s176 = scalar_lea.vmem [#allocation7], %s175
        %s177 = smul.u32 16, %s20
        %s178 = smul.u32 16, %s20
        %v180 = vld [vmem:[%s152] sm:$0xf]
        %v181 = vld [vmem:[%s152 + $0x4] sm:$0xf]
        %v182 = vld [vmem:[%s152 + $0x8] sm:$0xf]
        %v183 = vld [vmem:[%s152 + $0xc] sm:$0xf]
        %v184 = vld [vmem:[%s152 + $0x10] sm:$0xf]
        %v185 = vld [vmem:[%s152 + $0x14] sm:$0xf]
        %v186 = vld [vmem:[%s152 + $0x18] sm:$0xf]
        %v187 = vld [vmem:[%s152 + $0x1c] sm:$0xf]
        %v188 = vld [vmem:[%s152 + $0x20] sm:$0xf]
        %v189 = vld [vmem:[%s152 + $0x24] sm:$0xf]
        %v190 = vld [vmem:[%s152 + $0x28] sm:$0xf]
        %v191 = vld [vmem:[%s152 + $0x2c] sm:$0xf]
        %v192 = vld [vmem:[%s152 + $0x30] sm:$0xf]
        %v193 = vld [vmem:[%s152 + $0x34] sm:$0xf]
        %v194 = vld [vmem:[%s152 + $0x38] sm:$0xf]
        %v195 = vld [vmem:[%s152 + $0x3c] sm:$0xf]
        %v196 = vld [vmem:[#allocation5] sm:$0xf]
        %v197 = vld [vmem:[#allocation5 + $0x4] sm:$0xf]
        %v198 = vld [vmem:[#allocation5 + $0x8] sm:$0xf]
        %v199 = vld [vmem:[#allocation5 + $0xc] sm:$0xf]
        %v200 = vld [vmem:[#allocation5 + $0x10] sm:$0xf]
        %v201 = vld [vmem:[#allocation5 + $0x14] sm:$0xf]
        %v202 = vld [vmem:[#allocation5 + $0x18] sm:$0xf]
        %v203 = vld [vmem:[#allocation5 + $0x1c] sm:$0xf]
        %v204 = vld [vmem:[#allocation5 + $0x20] sm:$0xf]
        %v205 = vld [vmem:[#allocation5 + $0x24] sm:$0xf]
        %v206 = vld [vmem:[#allocation5 + $0x28] sm:$0xf]
        %v207 = vld [vmem:[#allocation5 + $0x2c] sm:$0xf]
        %v208 = vld [vmem:[#allocation5 + $0x30] sm:$0xf]
        %v209 = vld [vmem:[#allocation5 + $0x34] sm:$0xf]
        %v210 = vld [vmem:[#allocation5 + $0x38] sm:$0xf]
        %v211 = vld [vmem:[#allocation5 + $0x3c] sm:$0xf]
        %v228 = vunpack.c.l.b16 %v180
        %v229 = vunpack.c.l.b16 %v181
        %v230 = vunpack.c.l.b16 %v182
        %v231 = vunpack.c.l.b16 %v183
        %v232 = vunpack.c.l.b16 %v184
        %v233 = vunpack.c.l.b16 %v185
        %v234 = vunpack.c.l.b16 %v186
        %v235 = vunpack.c.l.b16 %v187
        %v236 = vunpack.c.l.b16 %v188
        %v237 = vunpack.c.l.b16 %v189
        %v238 = vunpack.c.l.b16 %v190
        %v239 = vunpack.c.l.b16 %v191
        %v240 = vunpack.c.l.b16 %v192
        %v241 = vunpack.c.l.b16 %v193
        %v242 = vunpack.c.l.b16 %v194
        %v243 = vunpack.c.l.b16 %v195
        %v244 = vpack.c.b16 %v229, %v228
        %v245 = vpack.c.b16 %v231, %v230
        %v246 = vpack.c.b16 %v233, %v232
        %v247 = vpack.c.b16 %v235, %v234
        %v248 = vpack.c.b16 %v237, %v236
        %v249 = vpack.c.b16 %v239, %v238
        %v250 = vpack.c.b16 %v241, %v240
        %v251 = vpack.c.b16 %v243, %v242
        %v276 = vunpack.c.l.b16 %v196
        %v277 = vunpack.c.l.b16 %v197
        %v278 = vunpack.c.l.b16 %v198
        %v279 = vunpack.c.l.b16 %v199
        %v280 = vunpack.c.l.b16 %v200
        %v281 = vunpack.c.l.b16 %v201
        %v282 = vunpack.c.l.b16 %v202
        %v283 = vunpack.c.l.b16 %v203
        %v284 = vunpack.c.l.b16 %v204
        %v285 = vunpack.c.l.b16 %v205
        %v286 = vunpack.c.l.b16 %v206
        %v287 = vunpack.c.l.b16 %v207
        %v288 = vunpack.c.l.b16 %v208
        %v289 = vunpack.c.l.b16 %v209
        %v290 = vunpack.c.l.b16 %v210
        %v291 = vunpack.c.l.b16 %v211
        %v292 = vpack.c.b16 %v277, %v276
        %v293 = vpack.c.b16 %v279, %v278
        %v294 = vpack.c.b16 %v281, %v280
        %v295 = vpack.c.b16 %v283, %v282
        %v296 = vpack.c.b16 %v285, %v284
        %v297 = vpack.c.b16 %v287, %v286
        %v298 = vpack.c.b16 %v289, %v288
        %v299 = vpack.c.b16 %v291, %v290
        %308 = vmatprep.subr.bf16.mxu0 0
        %309 = vmatpush1.bf16.msra.mxu0 %v299
        %310 = vmatprep.subr.bf16.mxu0 0
        %311 = vmatpush1.bf16.msra.mxu0 %v298
        %312 = vmatprep.subr.bf16.mxu0 0
        %313 = vmatpush1.bf16.msra.mxu0 %v297
        %314 = vmatprep.subr.bf16.mxu0 0
        %315 = vmatpush1.bf16.msra.mxu0 %v296
        %316 = vmatprep.subr.bf16.mxu0 0
        %317 = vmatpush1.bf16.msra.mxu0 %v295
        %318 = vmatprep.subr.bf16.mxu0 0
        %319 = vmatpush1.bf16.msra.mxu0 %v294
        %320 = vmatprep.subr.bf16.mxu0 0
        %321 = vmatpush1.bf16.msra.mxu0 %v293
        %322 = vmatprep.subr.bf16.mxu0 0
        %323 = vmatpush1.bf16.msra.mxu0 %v292
        %324 = vmatprep.subr.bf16.mxu0 0
        %325 = vmatpush2.bf16.msra.mxu0 0
        %326 = vmatprep.subr.bf16.mxu0 0
        %327 = vmatpush2.bf16.msra.mxu0 0
        %328 = vmatprep.subr.bf16.mxu0 0
        %329 = vmatpush2.bf16.msra.mxu0 0
        %330 = vmatprep.subr.bf16.mxu0 0
        %331 = vmatpush2.bf16.msra.mxu0 0
        %332 = vmatprep.subr.bf16.mxu0 0
        %333 = vmatpush2.bf16.msra.mxu0 0
        %334 = vmatprep.subr.bf16.mxu0 0
        %335 = vmatpush2.bf16.msra.mxu0 0
        %336 = vmatprep.subr.bf16.mxu0 0
        %337 = vmatpush2.bf16.msra.mxu0 0
        %338 = vmatprep.subr.bf16.mxu0 0
        %339 = vmatpush2.bf16.msra.mxu0 0
        %340 = vmatprep.mubr.bf16.mxu0 0
        %341 = vmatmul.mubr.bf16.gmra.mxu0 %v244
        %v342 = vpop.f32.mrf.mxu0
        %v343 = vadd.f32 0.0, %v342
        %v344 = vpop.f32.mrf.mxu0
        %v345 = vpop.f32.mrf.mxu0
        %v346 = vadd.f32 0.0, %v345
        %v347 = vpop.f32.mrf.mxu0
        %348 = vmatprep.mubr.bf16.mxu0 0
        %349 = vmatmul.mubr.bf16.gmra.mxu0 %v245
        %v350 = vpop.f32.mrf.mxu0
        %v351 = vadd.f32 0.0, %v350
        %v352 = vpop.f32.mrf.mxu0
        %v353 = vpop.f32.mrf.mxu0
        %v354 = vadd.f32 0.0, %v353
        %v355 = vpop.f32.mrf.mxu0
        %356 = vmatprep.mubr.bf16.mxu0 0
        %357 = vmatmul.mubr.bf16.gmra.mxu0 %v246
        %v358 = vpop.f32.mrf.mxu0
        %v359 = vadd.f32 0.0, %v358
        %v360 = vpop.f32.mrf.mxu0
        %v361 = vpop.f32.mrf.mxu0
        %v362 = vadd.f32 0.0, %v361
        %v363 = vpop.f32.mrf.mxu0
        %364 = vmatprep.mubr.bf16.mxu0 0
        %365 = vmatmul.mubr.bf16.gmra.mxu0 %v247
        %v366 = vpop.f32.mrf.mxu0
        %v367 = vadd.f32 0.0, %v366
        %v368 = vpop.f32.mrf.mxu0
        %v369 = vpop.f32.mrf.mxu0
        %v370 = vadd.f32 0.0, %v369
        %v371 = vpop.f32.mrf.mxu0
        %372 = vmatprep.mubr.bf16.mxu0 0
        %373 = vmatmul.mubr.bf16.gmra.mxu0 %v248
        %v374 = vpop.f32.mrf.mxu0
        %v375 = vadd.f32 0.0, %v374
        %v376 = vpop.f32.mrf.mxu0
        %v377 = vpop.f32.mrf.mxu0
        %v378 = vadd.f32 0.0, %v377
        %v379 = vpop.f32.mrf.mxu0
        %380 = vmatprep.mubr.bf16.mxu0 0
        %381 = vmatmul.mubr.bf16.gmra.mxu0 %v249
        %v382 = vpop.f32.mrf.mxu0
        %v383 = vadd.f32 0.0, %v382
        %v384 = vpop.f32.mrf.mxu0
        %v385 = vpop.f32.mrf.mxu0
        %v386 = vadd.f32 0.0, %v385
        %v387 = vpop.f32.mrf.mxu0
        %388 = vmatprep.mubr.bf16.mxu0 0
        %389 = vmatmul.mubr.bf16.gmra.mxu0 %v250
        %v390 = vpop.f32.mrf.mxu0
        %v391 = vadd.f32 0.0, %v390
        %v392 = vpop.f32.mrf.mxu0
        %v393 = vpop.f32.mrf.mxu0
        %v394 = vadd.f32 0.0, %v393
        %v395 = vpop.f32.mrf.mxu0
        %396 = vmatprep.mubr.bf16.mxu0 0
        %397 = vmatmul.mubr.bf16.gmra.mxu0 %v251
        %v398 = vpop.f32.mrf.mxu0
        %v399 = vadd.f32 0.0, %v398
        %v400 = vpop.f32.mrf.mxu0
        %v401 = vpop.f32.mrf.mxu0
        %v402 = vadd.f32 0.0, %v401
        %v403 = vpop.f32.mrf.mxu0
        %404 = vdwg.mxu0
        %v405 = vpack.c.bf16 %v346, %v343
        %v406 = vpack.c.bf16 %v354, %v351
        %v407 = vpack.c.bf16 %v362, %v359
        %v408 = vpack.c.bf16 %v370, %v367
        %v409 = vpack.c.bf16 %v378, %v375
        %v410 = vpack.c.bf16 %v386, %v383
        %v411 = vpack.c.bf16 %v394, %v391
        %v412 = vpack.c.bf16 %v402, %v399
        %v421 = vunpack.c.l.b16 %v405
        %v422 = vunpack.c.h.b16 %v405
        %v423 = vunpack.c.l.b16 %v406
        %v424 = vunpack.c.h.b16 %v406
        %v425 = vunpack.c.l.b16 %v407
        %v426 = vunpack.c.h.b16 %v407
        %v427 = vunpack.c.l.b16 %v408
        %v428 = vunpack.c.h.b16 %v408
        %v429 = vunpack.c.l.b16 %v409
        %v430 = vunpack.c.h.b16 %v409
        %v431 = vunpack.c.l.b16 %v410
        %v432 = vunpack.c.h.b16 %v410
        %v433 = vunpack.c.l.b16 %v411
        %v434 = vunpack.c.h.b16 %v411
        %v435 = vunpack.c.l.b16 %v412
        %v436 = vunpack.c.h.b16 %v412
        %v437 = vpack.c.b16 %v421, %v421
        %v438 = vpack.c.b16 %v422, %v422
        %v439 = vpack.c.b16 %v423, %v423
        %v440 = vpack.c.b16 %v424, %v424
        %v441 = vpack.c.b16 %v425, %v425
        %v442 = vpack.c.b16 %v426, %v426
        %v443 = vpack.c.b16 %v427, %v427
        %v444 = vpack.c.b16 %v428, %v428
        %v445 = vpack.c.b16 %v429, %v429
        %v446 = vpack.c.b16 %v430, %v430
        %v447 = vpack.c.b16 %v431, %v431
        %v448 = vpack.c.b16 %v432, %v432
        %v449 = vpack.c.b16 %v433, %v433
        %v450 = vpack.c.b16 %v434, %v434
        %v451 = vpack.c.b16 %v435, %v435
        %v452 = vpack.c.b16 %v436, %v436
        %469 = vst [vmem:[%s176] sm:$0xf] %v437
        %470 = vst [vmem:[%s176 + $0x4] sm:$0xf] %v438
        %471 = vst [vmem:[%s176 + $0x8] sm:$0xf] %v439
        %472 = vst [vmem:[%s176 + $0xc] sm:$0xf] %v440
        %473 = vst [vmem:[%s176 + $0x10] sm:$0xf] %v441
        %474 = vst [vmem:[%s176 + $0x14] sm:$0xf] %v442
        %475 = vst [vmem:[%s176 + $0x18] sm:$0xf] %v443
        %476 = vst [vmem:[%s176 + $0x1c] sm:$0xf] %v444
        %477 = vst [vmem:[%s176 + $0x20] sm:$0xf] %v445
        %478 = vst [vmem:[%s176 + $0x24] sm:$0xf] %v446
        %479 = vst [vmem:[%s176 + $0x28] sm:$0xf] %v447
        %480 = vst [vmem:[%s176 + $0x2c] sm:$0xf] %v448
        %481 = vst [vmem:[%s176 + $0x30] sm:$0xf] %v449
        %482 = vst [vmem:[%s176 + $0x34] sm:$0xf] %v450
        %483 = vst [vmem:[%s176 + $0x38] sm:$0xf] %v451
        %484 = vst [vmem:[%s176 + $0x3c] sm:$0xf] %v452
        %s485 = sand.u32 %s75, 1
        %s486 = scalar_lea.sflag [#allocation4], %s485
        %s487 = sand.u32 %s75, 1
        %s488 = smul.addr %s487, 64
        %s489 = scalar_lea.vmem [#allocation7], %s488
        // Predicated region
        $region37: #{tpu_custom_call.1} parent=27 // pred_check
          %p490 = pneg %p85
        $region38: #{tpu_custom_call.1} parent=27 // pred_check_branch
          %492 = sbr.rel (%p490) target = $region40
        $region39: #{tpu_custom_call.1} parent=27 // pred_region
          %s493 = smul.u32 16, %s20
          %s495 = ssub.s32 1024, 1024
          %496 = vsyncadd %s486, %s495
          %s497 = smul.addr %s493, 64
          %s498 = scalar_lea.hbm %s2, %s497
          %s499 = sshll.u32 %s489, 4
          %s500 = int_to_ptr.vmem [resolvable:$true] %s499
          %505 = dma.vmem_to_hbm [thread:$0]  %s500, 1024, %s498, %s486, 64, 64, 4
        $region40: #{tpu_custom_call.1} parent=27 // pred_fallthru
          _
      $region28: #{tpu_custom_call.1} parent=5 // pred_fallthru
        _
      %p506 = scmp.le.s32.totalorder 2, %s15
      // Predicated region
      $region41: #{tpu_custom_call.1} parent=5 // pred_check
        %p507 = pneg %p506
      $region42: #{tpu_custom_call.1} parent=5 // pred_check_branch
        %509 = sbr.rel (%p507) target = $region44
      $region43: #{tpu_custom_call.1} parent=5 // pred_region
        %s510 = ssub.s32 %s15, 2
        // Predicated region
        $region45: #{tpu_custom_call.1} parent=43 // pred_check
          %p511 = pneg %p91
        $region46: #{tpu_custom_call.1} parent=43 // pred_check_branch
          %513 = sbr.rel (%p511) target = $region48
        $region47: #{tpu_custom_call.1} parent=43 // pred_region
          %s514 = sand.u32 %s76, 1
          %s515 = scalar_lea.sflag [#allocation4], %s514
          %s516 = sand.u32 %s76, 1
          %s517 = smul.addr %s516, 64
          %s518 = scalar_lea.vmem [#allocation7], %s517
          %519 = dma.done %s515, 1024
        $region48: #{tpu_custom_call.1} parent=43 // pred_fallthru
          _
      $region44: #{tpu_custom_call.1} parent=5 // pred_fallthru
        _
    $region6: #{tpu_custom_call.1} parent=1 // loop_footer
      %s19 = sadd.s32 1, %s15
    $region7: #{tpu_custom_call.1} parent=1 // loop_footer_branch
      %14 = sbr.rel target = $region3
    $region8: #{tpu_custom_call.1} parent=1 // loop_exit
      _
    %520 = vsyncpa [#allocation3], 1
    %s521 = scalar_lea.sflag [#allocation3], 1
    %522 = vsyncpa %s521, 1
    %523 = vsyncpa [#allocation6], 1
    %524 = vsyncpa [#allocation4], 1
    %s525 = scalar_lea.sflag [#allocation4], 1
    %526 = vsyncpa %s525, 1

</llo_original>
